<compile_context>
chip_gen: v5e
topology: v5e:2x2
jax: 0.10.0
libtpu: 0.0.40
codegen_flags: <defaults>
</compile_context>

<pallas_src>
import functools

import jax
import jax.numpy as jnp
from jax.experimental import pallas as pl
from jax.experimental.pallas import tpu as pltpu

LANE = 128    # pad every feature axis to a multiple of the TPU lane width
SUBLANE = 8   # sublane granularity for the batch (second-to-last) axis

_PARAM_ORDER = ("w1", "b1", "w2", "b2", "wmv", "bmv",
                "wd1", "bd1", "wd2", "bd2", "wd3", "bd3")


def _round_up(n, m):
    return ((n + m - 1) // m) * m


def _pick_batch_tile(B):
    """Batch tile: big tiles amortize per-step overhead (mem-bound regime), but keep
    >= 2 grid steps whenever B allows so both v7x TensorCores get work."""
    if B < 128:
        # Toy path: one sublane-aligned tile; wall clock is fixed launch/DMA overhead.
        return _round_up(max(B, 1), SUBLANE)
    for bt in (512, 256, 128):
        if B >= 2 * bt:
            return bt
    return 128


def vae_kernel(x_ref, eps_ref,
               w1_ref, b1_ref, w2_ref, b2_ref,
               wmv_ref, bmv_ref,
               wd1_ref, bd1_ref, wd2_ref, bd2_ref, wd3_ref, bd3_ref,
               rec_ref, mlv_ref, *, z_dim):
    """One batch-tile of the VAE forward.

    Matmuls run bf16 x bf16 -> f32 on the MXU; bias/ReLU/exp/sigmoid stay f32 (VPU/EUP).
    mean & log_var come from one fused projection written as a single compact lane-dense
    slab: lanes [0, z) = mean, lanes [z, 2z) = log_var, rest zero.
    """
    bf16 = jnp.bfloat16
    f32 = jnp.float32

    # ---- encode (x streamed as bf16) ----
    h = jnp.dot(x_ref[...], w1_ref[...], preferred_element_type=f32) + b1_ref[...]
    h = jnp.maximum(h, 0.0)
    h = jnp.dot(h.astype(bf16), w2_ref[...], preferred_element_type=f32) + b2_ref[...]
    h = jnp.maximum(h, 0.0)

    # fused compact [mean | log_var] head: one MXU push, one lane-dense store
    mlv = jnp.dot(h.astype(bf16), wmv_ref[...], preferred_element_type=f32) + bmv_ref[...]
    mlv_ref[...] = mlv

    # ---- reparameterize without any lane relayout ----
    #   mlv lanes [0, z)   = mean
    #   mlv lanes [z, 2z)  = log_var
    #   eps values were pre-placed (host side) at lanes [z, 2z).
    #   wd1 rows are duplicated at [0, z) and [z, 2z), so  u @ wd1_dup == (mean + eps*std) @ wd1.
    lane = jax.lax.broadcasted_iota(jnp.int32, mlv.shape, dimension=1)
    mean_part = jnp.where(lane < z_dim, mlv, 0.0)
    lv_part = jnp.where((lane >= z_dim) & (lane < 2 * z_dim), mlv, 0.0)
    u = mean_part + eps_ref[...].astype(f32) * jnp.exp(lv_part * 0.5)

    # ---- decode ----
    y = jnp.dot(u.astype(bf16), wd1_ref[...], preferred_element_type=f32) + bd1_ref[...]
    y = jnp.maximum(y, 0.0)
    y = jnp.dot(y.astype(bf16), wd2_ref[...], preferred_element_type=f32) + bd2_ref[...]
    y = jnp.maximum(y, 0.0)
    y = jnp.dot(y.astype(bf16), wd3_ref[...], preferred_element_type=f32) + bd3_ref[...]
    rec_ref[...] = jax.nn.sigmoid(y)


@functools.partial(jax.jit, static_argnames=("z_dim", "bt"))
def vae_forward_padded(x_pad, eps_pad, packed, *, z_dim, bt):
    """Hot path: takes pre-padded bf16 inputs, returns padded f32 outputs.  No jnp.pad,
    no output slicing -- callers that keep data padded end-to-end pay zero extra HBM passes."""
    Bp, xp = x_pad.shape
    mvp = eps_pad.shape[1]                      # round_up(2*z_dim, 128)
    grid = (Bp // bt,)

    kernel = functools.partial(vae_kernel, z_dim=z_dim)

    def resident(arr):
        # Weights/biases stay resident in VMEM across all batch tiles (constant block index).
        return pl.BlockSpec(arr.shape, lambda i: (0, 0))

    in_specs = [
        pl.BlockSpec((bt, xp), lambda i: (i, 0)),    # x tile (bf16)
        pl.BlockSpec((bt, mvp), lambda i: (i, 0)),   # eps tile (bf16, values at lanes [z, 2z))
    ] + [resident(packed[k]) for k in _PARAM_ORDER]

    out_specs = (
        pl.BlockSpec((bt, xp), lambda i: (i, 0)),     # reconstruct
        pl.BlockSpec((bt, mvp), lambda i: (i, 0)),    # compact [mean | log_var] slab
    )
    out_shape = (
        jax.ShapeDtypeStruct((Bp, xp), jnp.float32),
        jax.ShapeDtypeStruct((Bp, mvp), jnp.float32),
    )

    rec, mlv = pl.pallas_call(
        kernel,
        grid=grid,
        in_specs=in_specs,
        out_specs=out_specs,
        out_shape=out_shape,
        compiler_params=pltpu.CompilerParams(
            dimension_semantics=("parallel",),        # megacore-shardable batch axis
            vmem_limit_bytes=32 * 1024 * 1024,        # raises v5e's 16 MiB scoped default,
                                                      # fits v7x; bt=512 tiles use ~1.5 MiB
        ),
    )(x_pad, eps_pad, *[packed[k] for k in _PARAM_ORDER])
    return rec, mlv


def pad_inputs(x, eps, *, x_dim, z_dim, bt):
    """Cast to bf16 and zero-pad ONCE, outside the jitted hot path.

    eps values are placed at lanes [z_dim, 2*z_dim) of the compact [mean | log_var] slab
    layout so the kernel never has to shuffle lanes.
    """
    B = x.shape[0]
    Bp = _round_up(B, bt)
    xp = _round_up(x_dim, LANE)
    mvp = _round_up(2 * z_dim, LANE)
    x_pad = jnp.zeros((Bp, xp), jnp.bfloat16).at[:B, :x_dim].set(x.astype(jnp.bfloat16))
    eps_pad = (jnp.zeros((Bp, mvp), jnp.bfloat16)
               .at[:B, z_dim:2 * z_dim].set(eps.astype(jnp.bfloat16)))
    return x_pad, eps_pad


def vae_forward(x, eps, packed, *, x_dim, z_dim):
    """Convenience wrapper: pad -> kernel -> slice back to logical shapes."""
    B = x.shape[0]
    bt = _pick_batch_tile(B)
    x_pad, eps_pad = pad_inputs(x, eps, x_dim=x_dim, z_dim=z_dim, bt=bt)
    rec, mlv = vae_forward_padded(x_pad, eps_pad, packed, z_dim=z_dim, bt=bt)
    reconstruct = rec[:B, :x_dim]
    mean = mlv[:B, :z_dim]
    log_var = mlv[:B, z_dim:2 * z_dim]
    return reconstruct, mean, log_var


def init_params(key, x_dim, h_dim, z_dim):
    """Raw f32 params, weights stored (in_features, out_features) (i.e. torch W.T)."""
    dims = [
        ("w1", x_dim, h_dim * 3), ("w2", h_dim * 3, h_dim),
        ("wm", h_dim, z_dim), ("wv", h_dim, z_dim),
        ("wd1", z_dim, h_dim * 3), ("wd2", h_dim * 3, h_dim),
        ("wd3", h_dim, x_dim),
    ]
    params = {}
    for name, fan_in, fan_out in dims:
        key, kw, kb = jax.random.split(key, 3)
        bound = 1.0 / (fan_in ** 0.5)
        params[name] = jax.random.uniform(kw, (fan_in, fan_out), jnp.float32, -bound, bound)
        params["b" + name[1:]] = jax.random.uniform(kb, (fan_out,), jnp.float32, -bound, bound)
    return params


def pack_params(raw):
    """Pad feature dims to 128-lane multiples, fuse the mean/log_var head into one
    compact slab, duplicate dec1 rows to match it, cast weights to bf16 (biases f32)."""
    def pad_w(w):
        fi, fo = w.shape
        out = jnp.zeros((_round_up(fi, LANE), _round_up(fo, LANE)), jnp.float32)
        return out.at[:fi, :fo].set(w).astype(jnp.bfloat16)

    def pad_b(b):
        fo = b.shape[0]
        return jnp.zeros((1, _round_up(fo, LANE)), jnp.float32).at[0, :fo].set(b)

    h_dim = raw["wm"].shape[0]
    z_dim = raw["wm"].shape[1]
    h3 = raw["wd1"].shape[1]
    hp = _round_up(h_dim, LANE)
    h3p = _round_up(h3, LANE)
    mvp = _round_up(2 * z_dim, LANE)

    packed = {}
    for name in ("w1", "w2", "wd2", "wd3"):
        packed[name] = pad_w(raw[name])
        packed["b" + name[1:]] = pad_b(raw["b" + name[1:]])

    # Compact fused head: columns [0, z) = mean, [z, 2z) = log_var, rest zero.
    wmv = jnp.zeros((hp, mvp), jnp.float32)
    wmv = wmv.at[:h_dim, :z_dim].set(raw["wm"]).at[:h_dim, z_dim:2 * z_dim].set(raw["wv"])
    packed["wmv"] = wmv.astype(jnp.bfloat16)
    bmv = jnp.zeros((1, mvp), jnp.float32)
    packed["bmv"] = bmv.at[0, :z_dim].set(raw["bm"]).at[0, z_dim:2 * z_dim].set(raw["bv"])

    # dec1 rows duplicated: rows [0, z) take the mean lanes, rows [z, 2z) take eps*std lanes.
    wd1 = jnp.zeros((mvp, h3p), jnp.float32)
    wd1 = wd1.at[:z_dim, :h3].set(raw["wd1"]).at[z_dim:2 * z_dim, :h3].set(raw["wd1"])
    packed["wd1"] = wd1.astype(jnp.bfloat16)
    packed["bd1"] = pad_b(raw["bd1"])
    return packed


def ref_forward(x, eps, raw):
    """Pure-JAX f32 reference (mirrors the PyTorch Net.forward with rand_like eps)."""
    relu = lambda v: jnp.maximum(v, 0.0)
    h = relu(x @ raw["w1"] + raw["b1"])
    h = relu(h @ raw["w2"] + raw["b2"])
    mean = h @ raw["wm"] + raw["bm"]
    log_var = h @ raw["wv"] + raw["bv"]
    z = mean + eps * jnp.exp(log_var * 0.5)
    y = relu(z @ raw["wd1"] + raw["bd1"])
    y = relu(y @ raw["wd2"] + raw["bd2"])
    return jax.nn.sigmoid(y @ raw["wd3"] + raw["bd3"]), mean, log_var


if __name__ == "__main__":
    # Small MLP-consistent shapes: x_dim=64 (flattened 8x8 image), h_dim=32, z_dim=16.
    B, X_DIM, H_DIM, Z_DIM = 8, 64, 32, 16

    key = jax.random.PRNGKey(0)
    key, kx, keps = jax.random.split(key, 3)
    x = jax.random.uniform(kx, (B, X_DIM), jnp.float32)       # image-like inputs in [0,1)
    eps = jax.random.uniform(keps, (B, Z_DIM), jnp.float32)   # torch.rand_like semantics

    raw = init_params(key, X_DIM, H_DIM, Z_DIM)
    packed = pack_params(raw)

    reconstruct, mean, log_var = vae_forward(x, eps, packed, x_dim=X_DIM, z_dim=Z_DIM)
    jax.block_until_ready((reconstruct, mean, log_var))

    assert reconstruct.shape == (B, X_DIM)
    assert mean.shape == (B, Z_DIM)
    assert log_var.shape == (B, Z_DIM)
    assert bool(jnp.all(jnp.isfinite(reconstruct)))
    assert bool(jnp.all((reconstruct >= 0.0) & (reconstruct <= 1.0)))

    # Cross-check against the pure-JAX f32 reference (loose tol: kernel streams bf16 and
    # runs bf16 matmuls with f32 accumulation).
    ref_rec, ref_mean, ref_lv = ref_forward(x, eps, raw)
    assert bool(jnp.allclose(reconstruct, ref_rec, atol=5e-2, rtol=5e-2))
    assert bool(jnp.allclose(mean, ref_mean, atol=5e-2, rtol=5e-2))
    assert bool(jnp.allclose(log_var, ref_lv, atol=5e-2, rtol=5e-2))

    print("KERNEL_OK")
</pallas_src>

<mosaic_0001>
module attributes {stable_mosaic.version = 11 : i64} {
  func.func @vae_kernel(%arg0: i32, %arg1: memref<8x128xbf16, #tpu.memory_space<vmem>>, %arg2: memref<8x128xbf16, #tpu.memory_space<vmem>>, %arg3: memref<128x128xbf16, #tpu.memory_space<vmem>>, %arg4: memref<1x128xf32, #tpu.memory_space<vmem>>, %arg5: memref<128x128xbf16, #tpu.memory_space<vmem>>, %arg6: memref<1x128xf32, #tpu.memory_space<vmem>>, %arg7: memref<128x128xbf16, #tpu.memory_space<vmem>>, %arg8: memref<1x128xf32, #tpu.memory_space<vmem>>, %arg9: memref<128x128xbf16, #tpu.memory_space<vmem>>, %arg10: memref<1x128xf32, #tpu.memory_space<vmem>>, %arg11: memref<128x128xbf16, #tpu.memory_space<vmem>>, %arg12: memref<1x128xf32, #tpu.memory_space<vmem>>, %arg13: memref<128x128xbf16, #tpu.memory_space<vmem>>, %arg14: memref<1x128xf32, #tpu.memory_space<vmem>>, %arg15: memref<8x128xf32, #tpu.memory_space<vmem>>, %arg16: memref<8x128xf32, #tpu.memory_space<vmem>>) attributes {dimension_semantics = [#tpu.dimension_semantics<parallel>], iteration_bounds = array<i64: 1>, scalar_prefetch = 0 : i64, scratch_operands = 0 : i64, tpu.core_type = #tpu.core_type<tc>, window_params = [{transform_indices = @transform_0, window_bounds = array<i64: 8, 128>}, {transform_indices = @transform_1, window_bounds = array<i64: 8, 128>}, {pipeline_mode = #tpu.pipeline_mode<synchronous>, transform_indices = @transform_2, window_bounds = array<i64: 128, 128>}, {pipeline_mode = #tpu.pipeline_mode<synchronous>, transform_indices = @transform_3, window_bounds = array<i64: 1, 128>}, {pipeline_mode = #tpu.pipeline_mode<synchronous>, transform_indices = @transform_4, window_bounds = array<i64: 128, 128>}, {pipeline_mode = #tpu.pipeline_mode<synchronous>, transform_indices = @transform_5, window_bounds = array<i64: 1, 128>}, {pipeline_mode = #tpu.pipeline_mode<synchronous>, transform_indices = @transform_6, window_bounds = array<i64: 128, 128>}, {pipeline_mode = #tpu.pipeline_mode<synchronous>, transform_indices = @transform_7, window_bounds = array<i64: 1, 128>}, {pipeline_mode = #tpu.pipeline_mode<synchronous>, transform_indices = @transform_8, window_bounds = array<i64: 128, 128>}, {pipeline_mode = #tpu.pipeline_mode<synchronous>, transform_indices = @transform_9, window_bounds = array<i64: 1, 128>}, {pipeline_mode = #tpu.pipeline_mode<synchronous>, transform_indices = @transform_10, window_bounds = array<i64: 128, 128>}, {pipeline_mode = #tpu.pipeline_mode<synchronous>, transform_indices = @transform_11, window_bounds = array<i64: 1, 128>}, {pipeline_mode = #tpu.pipeline_mode<synchronous>, transform_indices = @transform_12, window_bounds = array<i64: 128, 128>}, {pipeline_mode = #tpu.pipeline_mode<synchronous>, transform_indices = @transform_13, window_bounds = array<i64: 1, 128>}, {transform_indices = @transform_14, window_bounds = array<i64: 8, 128>}, {transform_indices = @transform_15, window_bounds = array<i64: 8, 128>}]} {
    %c0 = arith.constant 0 : index
    %c0_0 = arith.constant 0 : index
    %0 = vector.load %arg1[%c0, %c0_0] : memref<8x128xbf16, #tpu.memory_space<vmem>>, vector<8x128xbf16>
    %c0_1 = arith.constant 0 : index
    %c0_2 = arith.constant 0 : index
    %1 = vector.load %arg3[%c0_1, %c0_2] : memref<128x128xbf16, #tpu.memory_space<vmem>>, vector<128x128xbf16>
    %cst = arith.constant dense<0.000000e+00> : vector<8x128xf32>
    %2 = tpu.matmul %0, %1, %cst {dimension_numbers = #tpu.dot_dimension_numbers<[1], [0], [0], [1], [0, 0, 1, 1], [], []>} : vector<8x128xbf16>, vector<128x128xbf16>, vector<8x128xf32> -> vector<8x128xf32>
    %c0_3 = arith.constant 0 : index
    %c0_4 = arith.constant 0 : index
    %3 = vector.load %arg4[%c0_3, %c0_4] : memref<1x128xf32, #tpu.memory_space<vmem>>, vector<1x128xf32>
    %4 = vector.broadcast %3 : vector<1x128xf32> to vector<8x128xf32>
    %5 = arith.addf %2, %4 : vector<8x128xf32>
    %cst_5 = arith.constant 0.000000e+00 : f32
    %6 = vector.broadcast %cst_5 : f32 to vector<8x128xf32>
    %7 = arith.maximumf %5, %6 : vector<8x128xf32>
    %8 = arith.truncf %7 : vector<8x128xf32> to vector<8x128xbf16>
    %c0_6 = arith.constant 0 : index
    %c0_7 = arith.constant 0 : index
    %9 = vector.load %arg5[%c0_6, %c0_7] : memref<128x128xbf16, #tpu.memory_space<vmem>>, vector<128x128xbf16>
    %cst_8 = arith.constant dense<0.000000e+00> : vector<8x128xf32>
    %10 = tpu.matmul %8, %9, %cst_8 {dimension_numbers = #tpu.dot_dimension_numbers<[1], [0], [0], [1], [0, 0, 1, 1], [], []>} : vector<8x128xbf16>, vector<128x128xbf16>, vector<8x128xf32> -> vector<8x128xf32>
    %c0_9 = arith.constant 0 : index
    %c0_10 = arith.constant 0 : index
    %11 = vector.load %arg6[%c0_9, %c0_10] : memref<1x128xf32, #tpu.memory_space<vmem>>, vector<1x128xf32>
    %12 = vector.broadcast %11 : vector<1x128xf32> to vector<8x128xf32>
    %13 = arith.addf %10, %12 : vector<8x128xf32>
    %cst_11 = arith.constant 0.000000e+00 : f32
    %14 = vector.broadcast %cst_11 : f32 to vector<8x128xf32>
    %15 = arith.maximumf %13, %14 : vector<8x128xf32>
    %16 = arith.truncf %15 : vector<8x128xf32> to vector<8x128xbf16>
    %c0_12 = arith.constant 0 : index
    %c0_13 = arith.constant 0 : index
    %17 = vector.load %arg7[%c0_12, %c0_13] : memref<128x128xbf16, #tpu.memory_space<vmem>>, vector<128x128xbf16>
    %cst_14 = arith.constant dense<0.000000e+00> : vector<8x128xf32>
    %18 = tpu.matmul %16, %17, %cst_14 {dimension_numbers = #tpu.dot_dimension_numbers<[1], [0], [0], [1], [0, 0, 1, 1], [], []>} : vector<8x128xbf16>, vector<128x128xbf16>, vector<8x128xf32> -> vector<8x128xf32>
    %c0_15 = arith.constant 0 : index
    %c0_16 = arith.constant 0 : index
    %19 = vector.load %arg8[%c0_15, %c0_16] : memref<1x128xf32, #tpu.memory_space<vmem>>, vector<1x128xf32>
    %20 = vector.broadcast %19 : vector<1x128xf32> to vector<8x128xf32>
    %21 = arith.addf %18, %20 : vector<8x128xf32>
    %c0_17 = arith.constant 0 : index
    %c0_18 = arith.constant 0 : index
    %22 = vector.load %arg16[%c0_17, %c0_18] : memref<8x128xf32, #tpu.memory_space<vmem>>, vector<8x128xf32>
    tpu.vector_store %arg16[%c0_17, %c0_18], %21 {strides = array<i32>} : memref<8x128xf32, #tpu.memory_space<vmem>>, vector<8x128xf32>,
    %23 = tpu.iota {dimensions = array<i32: 1>} : vector<8x128xi32>
    %c16_i32 = arith.constant 16 : i32
    %24 = vector.broadcast %c16_i32 : i32 to vector<8x128xi32>
    %25 = arith.cmpi slt, %23, %24 : vector<8x128xi32>
    %cst_19 = arith.constant 0.000000e+00 : f32
    %26 = vector.broadcast %cst_19 : f32 to vector<8x128xf32>
    %27 = arith.select %25, %21, %26 : vector<8x128xi1>, vector<8x128xf32>
    %c16_i32_20 = arith.constant 16 : i32
    %28 = vector.broadcast %c16_i32_20 : i32 to vector<8x128xi32>
    %29 = arith.cmpi sge, %23, %28 : vector<8x128xi32>
    %c32_i32 = arith.constant 32 : i32
    %30 = vector.broadcast %c32_i32 : i32 to vector<8x128xi32>
    %31 = arith.cmpi slt, %23, %30 : vector<8x128xi32>
    %32 = arith.andi %29, %31 : vector<8x128xi1>
    %cst_21 = arith.constant 0.000000e+00 : f32
    %33 = vector.broadcast %cst_21 : f32 to vector<8x128xf32>
    %34 = arith.select %32, %21, %33 : vector<8x128xi1>, vector<8x128xf32>
    %c0_22 = arith.constant 0 : index
    %c0_23 = arith.constant 0 : index
    %35 = vector.load %arg2[%c0_22, %c0_23] : memref<8x128xbf16, #tpu.memory_space<vmem>>, vector<8x128xbf16>
    %36 = arith.extf %35 : vector<8x128xbf16> to vector<8x128xf32>
    %cst_24 = arith.constant 5.000000e-01 : f32
    %37 = vector.broadcast %cst_24 : f32 to vector<8x128xf32>
    %38 = arith.mulf %34, %37 : vector<8x128xf32>
    %39 = math.exp %38 : vector<8x128xf32>
    %40 = arith.mulf %36, %39 : vector<8x128xf32>
    %41 = arith.addf %27, %40 : vector<8x128xf32>
    %42 = arith.truncf %41 : vector<8x128xf32> to vector<8x128xbf16>
    %c0_25 = arith.constant 0 : index
    %c0_26 = arith.constant 0 : index
    %43 = vector.load %arg9[%c0_25, %c0_26] : memref<128x128xbf16, #tpu.memory_space<vmem>>, vector<128x128xbf16>
    %cst_27 = arith.constant dense<0.000000e+00> : vector<8x128xf32>
    %44 = tpu.matmul %42, %43, %cst_27 {dimension_numbers = #tpu.dot_dimension_numbers<[1], [0], [0], [1], [0, 0, 1, 1], [], []>} : vector<8x128xbf16>, vector<128x128xbf16>, vector<8x128xf32> -> vector<8x128xf32>
    %c0_28 = arith.constant 0 : index
    %c0_29 = arith.constant 0 : index
    %45 = vector.load %arg10[%c0_28, %c0_29] : memref<1x128xf32, #tpu.memory_space<vmem>>, vector<1x128xf32>
    %46 = vector.broadcast %45 : vector<1x128xf32> to vector<8x128xf32>
    %47 = arith.addf %44, %46 : vector<8x128xf32>
    %cst_30 = arith.constant 0.000000e+00 : f32
    %48 = vector.broadcast %cst_30 : f32 to vector<8x128xf32>
    %49 = arith.maximumf %47, %48 : vector<8x128xf32>
    %50 = arith.truncf %49 : vector<8x128xf32> to vector<8x128xbf16>
    %c0_31 = arith.constant 0 : index
    %c0_32 = arith.constant 0 : index
    %51 = vector.load %arg11[%c0_31, %c0_32] : memref<128x128xbf16, #tpu.memory_space<vmem>>, vector<128x128xbf16>
    %cst_33 = arith.constant dense<0.000000e+00> : vector<8x128xf32>
    %52 = tpu.matmul %50, %51, %cst_33 {dimension_numbers = #tpu.dot_dimension_numbers<[1], [0], [0], [1], [0, 0, 1, 1], [], []>} : vector<8x128xbf16>, vector<128x128xbf16>, vector<8x128xf32> -> vector<8x128xf32>
    %c0_34 = arith.constant 0 : index
    %c0_35 = arith.constant 0 : index
    %53 = vector.load %arg12[%c0_34, %c0_35] : memref<1x128xf32, #tpu.memory_space<vmem>>, vector<1x128xf32>
    %54 = vector.broadcast %53 : vector<1x128xf32> to vector<8x128xf32>
    %55 = arith.addf %52, %54 : vector<8x128xf32>
    %cst_36 = arith.constant 0.000000e+00 : f32
    %56 = vector.broadcast %cst_36 : f32 to vector<8x128xf32>
    %57 = arith.maximumf %55, %56 : vector<8x128xf32>
    %58 = arith.truncf %57 : vector<8x128xf32> to vector<8x128xbf16>
    %c0_37 = arith.constant 0 : index
    %c0_38 = arith.constant 0 : index
    %59 = vector.load %arg13[%c0_37, %c0_38] : memref<128x128xbf16, #tpu.memory_space<vmem>>, vector<128x128xbf16>
    %cst_39 = arith.constant dense<0.000000e+00> : vector<8x128xf32>
    %60 = tpu.matmul %58, %59, %cst_39 {dimension_numbers = #tpu.dot_dimension_numbers<[1], [0], [0], [1], [0, 0, 1, 1], [], []>} : vector<8x128xbf16>, vector<128x128xbf16>, vector<8x128xf32> -> vector<8x128xf32>
    %c0_40 = arith.constant 0 : index
    %c0_41 = arith.constant 0 : index
    %61 = vector.load %arg14[%c0_40, %c0_41] : memref<1x128xf32, #tpu.memory_space<vmem>>, vector<1x128xf32>
    %62 = vector.broadcast %61 : vector<1x128xf32> to vector<8x128xf32>
    %63 = arith.addf %60, %62 : vector<8x128xf32>
    %64 = arith.negf %63 : vector<8x128xf32>
    %65 = math.exp %64 : vector<8x128xf32>
    %cst_42 = arith.constant 1.000000e+00 : f32
    %66 = vector.broadcast %cst_42 : f32 to vector<8x128xf32>
    %67 = arith.addf %66, %65 : vector<8x128xf32>
    %68 = arith.divf %66, %67 : vector<8x128xf32>
    %c0_43 = arith.constant 0 : index
    %c0_44 = arith.constant 0 : index
    %69 = vector.load %arg15[%c0_43, %c0_44] : memref<8x128xf32, #tpu.memory_space<vmem>>, vector<8x128xf32>
    tpu.vector_store %arg15[%c0_43, %c0_44], %68 {strides = array<i32>} : memref<8x128xf32, #tpu.memory_space<vmem>>, vector<8x128xf32>,
    return
  }
  func.func @transform_0(%arg0: i32) -> (i32, i32) {
    %c0_i32 = arith.constant 0 : i32
    %c0_i32_0 = arith.constant 0 : i32
    return %arg0, %c0_i32 : i32, i32
  }
  func.func @transform_1(%arg0: i32) -> (i32, i32) {
    %c0_i32 = arith.constant 0 : i32
    %c0_i32_0 = arith.constant 0 : i32
    return %arg0, %c0_i32 : i32, i32
  }
  func.func @transform_2(%arg0: i32) -> (i32, i32) {
    %c0_i32 = arith.constant 0 : i32
    %c0_i32_0 = arith.constant 0 : i32
    %c0_i32_1 = arith.constant 0 : i32
    return %c0_i32, %c0_i32_0 : i32, i32
  }
  func.func @transform_3(%arg0: i32) -> (i32, i32) {
    %c0_i32 = arith.constant 0 : i32
    %c0_i32_0 = arith.constant 0 : i32
    %c0_i32_1 = arith.constant 0 : i32
    return %c0_i32, %c0_i32_0 : i32, i32
  }
  func.func @transform_4(%arg0: i32) -> (i32, i32) {
    %c0_i32 = arith.constant 0 : i32
    %c0_i32_0 = arith.constant 0 : i32
    %c0_i32_1 = arith.constant 0 : i32
    return %c0_i32, %c0_i32_0 : i32, i32
  }
  func.func @transform_5(%arg0: i32) -> (i32, i32) {
    %c0_i32 = arith.constant 0 : i32
    %c0_i32_0 = arith.constant 0 : i32
    %c0_i32_1 = arith.constant 0 : i32
    return %c0_i32, %c0_i32_0 : i32, i32
  }
  func.func @transform_6(%arg0: i32) -> (i32, i32) {
    %c0_i32 = arith.constant 0 : i32
    %c0_i32_0 = arith.constant 0 : i32
    %c0_i32_1 = arith.constant 0 : i32
    return %c0_i32, %c0_i32_0 : i32, i32
  }
  func.func @transform_7(%arg0: i32) -> (i32, i32) {
    %c0_i32 = arith.constant 0 : i32
    %c0_i32_0 = arith.constant 0 : i32
    %c0_i32_1 = arith.constant 0 : i32
    return %c0_i32, %c0_i32_0 : i32, i32
  }
  func.func @transform_8(%arg0: i32) -> (i32, i32) {
    %c0_i32 = arith.constant 0 : i32
    %c0_i32_0 = arith.constant 0 : i32
    %c0_i32_1 = arith.constant 0 : i32
    return %c0_i32, %c0_i32_0 : i32, i32
  }
  func.func @transform_9(%arg0: i32) -> (i32, i32) {
    %c0_i32 = arith.constant 0 : i32
    %c0_i32_0 = arith.constant 0 : i32
    %c0_i32_1 = arith.constant 0 : i32
    return %c0_i32, %c0_i32_0 : i32, i32
  }
  func.func @transform_10(%arg0: i32) -> (i32, i32) {
    %c0_i32 = arith.constant 0 : i32
    %c0_i32_0 = arith.constant 0 : i32
    %c0_i32_1 = arith.constant 0 : i32
    return %c0_i32, %c0_i32_0 : i32, i32
  }
  func.func @transform_11(%arg0: i32) -> (i32, i32) {
    %c0_i32 = arith.constant 0 : i32
    %c0_i32_0 = arith.constant 0 : i32
    %c0_i32_1 = arith.constant 0 : i32
    return %c0_i32, %c0_i32_0 : i32, i32
  }
  func.func @transform_12(%arg0: i32) -> (i32, i32) {
    %c0_i32 = arith.constant 0 : i32
    %c0_i32_0 = arith.constant 0 : i32
    %c0_i32_1 = arith.constant 0 : i32
    return %c0_i32, %c0_i32_0 : i32, i32
  }
  func.func @transform_13(%arg0: i32) -> (i32, i32) {
    %c0_i32 = arith.constant 0 : i32
    %c0_i32_0 = arith.constant 0 : i32
    %c0_i32_1 = arith.constant 0 : i32
    return %c0_i32, %c0_i32_0 : i32, i32
  }
  func.func @transform_14(%arg0: i32) -> (i32, i32) {
    %c0_i32 = arith.constant 0 : i32
    %c0_i32_0 = arith.constant 0 : i32
    return %arg0, %c0_i32 : i32, i32
  }
  func.func @transform_15(%arg0: i32) -> (i32, i32) {
    %c0_i32 = arith.constant 0 : i32
    %c0_i32_0 = arith.constant 0 : i32
    return %arg0, %c0_i32 : i32, i32
  }
}

</mosaic_0001>

<llo_original>
// kernel: vae_forward_padded.1
$region0: #{vae_forward_padded.1}
  #allocation0 [shape = 'u32[]', space=smem, size = 0x4, offset = 0x4, fixed_abs, tag = 'smem constant byte address 0x4 - core index']
  #allocation1 [shape = 'u32[72,128]{1,0:T(1,128)}', space=vmem, size = 0x9000, scoped, tag = 'internal scratch']
  %s0 = inlined_call_operand.hbm [shape: bf16[8,128], index: 0, kind: input, shape index: {}]
  %s1 = inlined_call_operand.hbm [shape: bf16[8,128], index: 1, kind: input, shape index: {}]
  %s2 = inlined_call_operand.hbm [shape: bf16[128,128], index: 2, kind: input, shape index: {}]
  %s3 = inlined_call_operand.vmem [shape: f32[1,128], index: 3, kind: input, shape index: {}]
  %s4 = inlined_call_operand.hbm [shape: bf16[128,128], index: 4, kind: input, shape index: {}]
  %s5 = inlined_call_operand.vmem [shape: f32[1,128], index: 5, kind: input, shape index: {}]
  %s6 = inlined_call_operand.hbm [shape: bf16[128,128], index: 6, kind: input, shape index: {}]
  %s7 = inlined_call_operand.vmem [shape: f32[1,128], index: 7, kind: input, shape index: {}]
  %s8 = inlined_call_operand.hbm [shape: bf16[128,128], index: 8, kind: input, shape index: {}]
  %s9 = inlined_call_operand.hbm [shape: f32[1,128], index: 9, kind: input, shape index: {}]
  %s10 = inlined_call_operand.hbm [shape: bf16[128,128], index: 10, kind: input, shape index: {}]
  %s11 = inlined_call_operand.vmem [shape: f32[1,128], index: 11, kind: input, shape index: {}]
  %s12 = inlined_call_operand.hbm [shape: bf16[128,128], index: 12, kind: input, shape index: {}]
  %s13 = inlined_call_operand.vmem [shape: f32[1,128], index: 13, kind: input, shape index: {}]
  %s14 = inlined_call_operand.hbm [shape: f32[8,128], index: 14, kind: output, shape index: {0}]
  %s15 = inlined_call_operand.hbm [shape: f32[8,128], index: 15, kind: output, shape index: {1}]
  %16 = xla_tuple %s14, %s15
  %s17 = sld [smem:[#allocation0]]
  $region110: #{vae_forward_padded.1} parent=0
    _
  %s19 = ssub.s32 1, %s17
  %s20 = scalar_select 0, %s19, %s17
  $region1: #{vae_forward_padded.1} parent=0
    #allocation2 [shape = 'u8[2048]{0}', space=vmem, size = 0x800, scoped, tag = 'input window, operand 0, single buffered']
    #allocation3 [shape = 's32[1]{0}', space=sflag, size = 0x4, scoped, tag = 'scoped memory for vae_forward_padded.1']
    #allocation4 [shape = 's32[1]{0}', space=sflag, size = 0x4, scoped, tag = 'scoped memory for vae_forward_padded.1']
    #allocation5 [shape = 'u8[2048]{0}', space=vmem, size = 0x800, scoped, tag = 'input window, operand 1, single buffered']
    #allocation6 [shape = 's32[1]{0}', space=sflag, size = 0x4, scoped, tag = 'scoped memory for vae_forward_padded.1']
    #allocation7 [shape = 'u8[32768]{0}', space=vmem, size = 0x8000, scoped, tag = 'input window, operand 2, single buffered']
    #allocation8 [shape = 'u8[32768]{0}', space=vmem, size = 0x8000, scoped, tag = 'input window, operand 4, single buffered']
    #allocation9 [shape = 's32[1]{0}', space=sflag, size = 0x4, scoped, tag = 'scoped memory for vae_forward_padded.1']
    #allocation10 [shape = 'u8[32768]{0}', space=vmem, size = 0x8000, scoped, tag = 'input window, operand 6, single buffered']
    #allocation11 [shape = 'u8[32768]{0}', space=vmem, size = 0x8000, scoped, tag = 'input window, operand 8, single buffered']
    #allocation12 [shape = 's32[1]{0}', space=sflag, size = 0x4, scoped, tag = 'scoped memory for vae_forward_padded.1']
    #allocation13 [shape = 'u8[512]{0}', space=vmem, size = 0x400, scoped, tag = 'input window, operand 9, single buffered']
    #allocation14 [shape = 'u8[32768]{0}', space=vmem, size = 0x8000, scoped, tag = 'input window, operand 10, single buffered']
    #allocation15 [shape = 's32[1]{0}', space=sflag, size = 0x4, scoped, tag = 'scoped memory for vae_forward_padded.1']
    #allocation16 [shape = 'u8[32768]{0}', space=vmem, size = 0x8000, scoped, tag = 'input window, operand 12, single buffered']
    #allocation17 [shape = 'u8[4096]{0}', space=vmem, size = 0x1000, scoped, tag = 'output window, operand 0, single buffered']
    #allocation18 [shape = 'u8[4096]{0}', space=vmem, size = 0x1000, scoped, tag = 'output window, operand 1, single buffered']
    #allocation19 [shape = 's32[1]{0}', space=sflag, size = 0x4, scoped, tag = 'scoped memory for vae_forward_padded.1']
    %21 = vsyncpa [#allocation3], 0
    %22 = vsyncpa [#allocation6], 0
    %23 = vsyncpa [#allocation9], 0
    %24 = vsyncpa [#allocation12], 0
    %25 = vsyncpa [#allocation15], 0
    %26 = vsyncpa [#allocation4], 0
    %27 = vsyncpa [#allocation19], 0
    // Predicated region
    $region2: #{vae_forward_padded.1} parent=1 // pred_check
      _
    $region3: #{vae_forward_padded.1} parent=1 // pred_check_branch
      %29 = sbr.rel (0) target = $region5
    $region4: #{vae_forward_padded.1} parent=1 // pred_region
      %31 = vsyncadd [#allocation3], 0
      %s33 = sshll.u32 %s0, 4
      %s34 = int_to_ptr.hbm [resolvable:$true] %s33
      %s35 = sshll.u32 [#allocation2], 4
      %s36 = int_to_ptr.vmem [resolvable:$true] %s35
      %38 = dma.hbm_to_vmem [thread:$0]  %s34, 64, %s36, [#allocation3]
    $region5: #{vae_forward_padded.1} parent=1 // pred_fallthru
      _
    // Predicated region
    $region6: #{vae_forward_padded.1} parent=1 // pred_check
      _
    $region7: #{vae_forward_padded.1} parent=1 // pred_check_branch
      %40 = sbr.rel (0) target = $region9
    $region8: #{vae_forward_padded.1} parent=1 // pred_region
      %42 = vsyncadd [#allocation6], 0
      %s44 = sshll.u32 %s1, 4
      %s45 = int_to_ptr.hbm [resolvable:$true] %s44
      %s46 = sshll.u32 [#allocation5], 4
      %s47 = int_to_ptr.vmem [resolvable:$true] %s46
      %49 = dma.hbm_to_vmem [thread:$0]  %s45, 64, %s47, [#allocation6]
    $region9: #{vae_forward_padded.1} parent=1 // pred_fallthru
      _
    // Predicated region
    $region10: #{vae_forward_padded.1} parent=1 // pred_check
      _
    $region11: #{vae_forward_padded.1} parent=1 // pred_check_branch
      %51 = sbr.rel (0) target = $region13
    $region12: #{vae_forward_padded.1} parent=1 // pred_region
      %53 = vsyncadd [#allocation6], 0
      %s54 = sshll.u32 %s2, 4
      %s55 = int_to_ptr.hbm [resolvable:$true] %s54
      %s56 = sshll.u32 [#allocation7], 4
      %s57 = int_to_ptr.vmem [resolvable:$true] %s56
      %62 = dma.hbm_to_vmem [thread:$0]  %s55, 1024, %s57, [#allocation6], 64, 64, 4
    $region13: #{vae_forward_padded.1} parent=1 // pred_fallthru
      _
    // Predicated region
    $region14: #{vae_forward_padded.1} parent=1 // pred_check
      _
    $region15: #{vae_forward_padded.1} parent=1 // pred_check_branch
      %64 = sbr.rel (0) target = $region17
    $region16: #{vae_forward_padded.1} parent=1 // pred_region
      _
    $region17: #{vae_forward_padded.1} parent=1 // pred_fallthru
      _
    // Predicated region
    $region18: #{vae_forward_padded.1} parent=1 // pred_check
      _
    $region19: #{vae_forward_padded.1} parent=1 // pred_check_branch
      %66 = sbr.rel (0) target = $region21
    $region20: #{vae_forward_padded.1} parent=1 // pred_region
      %68 = vsyncadd [#allocation9], 0
      %s69 = sshll.u32 %s4, 4
      %s70 = int_to_ptr.hbm [resolvable:$true] %s69
      %s71 = sshll.u32 [#allocation8], 4
      %s72 = int_to_ptr.vmem [resolvable:$true] %s71
      %77 = dma.hbm_to_vmem [thread:$0]  %s70, 1024, %s72, [#allocation9], 64, 64, 4
    $region21: #{vae_forward_padded.1} parent=1 // pred_fallthru
      _
    // Predicated region
    $region22: #{vae_forward_padded.1} parent=1 // pred_check
      _
    $region23: #{vae_forward_padded.1} parent=1 // pred_check_branch
      %79 = sbr.rel (0) target = $region25
    $region24: #{vae_forward_padded.1} parent=1 // pred_region
      _
    $region25: #{vae_forward_padded.1} parent=1 // pred_fallthru
      _
    // Predicated region
    $region26: #{vae_forward_padded.1} parent=1 // pred_check
      _
    $region27: #{vae_forward_padded.1} parent=1 // pred_check_branch
      %81 = sbr.rel (0) target = $region29
    $region28: #{vae_forward_padded.1} parent=1 // pred_region
      %83 = vsyncadd [#allocation9], 0
      %s84 = sshll.u32 %s6, 4
      %s85 = int_to_ptr.hbm [resolvable:$true] %s84
      %s86 = sshll.u32 [#allocation10], 4
      %s87 = int_to_ptr.vmem [resolvable:$true] %s86
      %92 = dma.hbm_to_vmem [thread:$0]  %s85, 1024, %s87, [#allocation9], 64, 64, 4
    $region29: #{vae_forward_padded.1} parent=1 // pred_fallthru
      _
    // Predicated region
    $region30: #{vae_forward_padded.1} parent=1 // pred_check
      _
    $region31: #{vae_forward_padded.1} parent=1 // pred_check_branch
      %94 = sbr.rel (0) target = $region33
    $region32: #{vae_forward_padded.1} parent=1 // pred_region
      _
    $region33: #{vae_forward_padded.1} parent=1 // pred_fallthru
      _
    // Predicated region
    $region34: #{vae_forward_padded.1} parent=1 // pred_check
      _
    $region35: #{vae_forward_padded.1} parent=1 // pred_check_branch
      %96 = sbr.rel (0) target = $region37
    $region36: #{vae_forward_padded.1} parent=1 // pred_region
      %98 = vsyncadd [#allocation12], 0
      %s99 = sshll.u32 %s8, 4
      %s100 = int_to_ptr.hbm [resolvable:$true] %s99
      %s101 = sshll.u32 [#allocation11], 4
      %s102 = int_to_ptr.vmem [resolvable:$true] %s101
      %107 = dma.hbm_to_vmem [thread:$0]  %s100, 1024, %s102, [#allocation12], 64, 64, 4
    $region37: #{vae_forward_padded.1} parent=1 // pred_fallthru
      _
    // Predicated region
    $region38: #{vae_forward_padded.1} parent=1 // pred_check
      _
    $region39: #{vae_forward_padded.1} parent=1 // pred_check_branch
      %109 = sbr.rel (0) target = $region41
    $region40: #{vae_forward_padded.1} parent=1 // pred_region
      %111 = vsyncadd [#allocation12], 0
      %s113 = sshll.u32 %s9, 4
      %s114 = int_to_ptr.hbm [resolvable:$true] %s113
      %s115 = sshll.u32 [#allocation13], 4
      %s116 = int_to_ptr.vmem [resolvable:$true] %s115
      %118 = dma.hbm_to_vmem [thread:$0]  %s114, 16, %s116, [#allocation12]
    $region41: #{vae_forward_padded.1} parent=1 // pred_fallthru
      _
    // Predicated region
    $region42: #{vae_forward_padded.1} parent=1 // pred_check
      _
    $region43: #{vae_forward_padded.1} parent=1 // pred_check_branch
      %120 = sbr.rel (0) target = $region45
    $region44: #{vae_forward_padded.1} parent=1 // pred_region
      %122 = vsyncadd [#allocation15], 0
      %s123 = sshll.u32 %s10, 4
      %s124 = int_to_ptr.hbm [resolvable:$true] %s123
      %s125 = sshll.u32 [#allocation14], 4
      %s126 = int_to_ptr.vmem [resolvable:$true] %s125
      %131 = dma.hbm_to_vmem [thread:$0]  %s124, 1024, %s126, [#allocation15], 64, 64, 4
    $region45: #{vae_forward_padded.1} parent=1 // pred_fallthru
      _
    // Predicated region
    $region46: #{vae_forward_padded.1} parent=1 // pred_check
      _
    $region47: #{vae_forward_padded.1} parent=1 // pred_check_branch
      %133 = sbr.rel (0) target = $region49
    $region48: #{vae_forward_padded.1} parent=1 // pred_region
      _
    $region49: #{vae_forward_padded.1} parent=1 // pred_fallthru
      _
    // Predicated region
    $region50: #{vae_forward_padded.1} parent=1 // pred_check
      _
    $region51: #{vae_forward_padded.1} parent=1 // pred_check_branch
      %135 = sbr.rel (0) target = $region53
    $region52: #{vae_forward_padded.1} parent=1 // pred_region
      %137 = vsyncadd [#allocation15], 0
      %s138 = sshll.u32 %s12, 4
      %s139 = int_to_ptr.hbm [resolvable:$true] %s138
      %s140 = sshll.u32 [#allocation16], 4
      %s141 = int_to_ptr.vmem [resolvable:$true] %s140
      %146 = dma.hbm_to_vmem [thread:$0]  %s139, 1024, %s141, [#allocation15], 64, 64, 4
    $region53: #{vae_forward_padded.1} parent=1 // pred_fallthru
      _
    // Predicated region
    $region54: #{vae_forward_padded.1} parent=1 // pred_check
      _
    $region55: #{vae_forward_padded.1} parent=1 // pred_check_branch
      %148 = sbr.rel (0) target = $region57
    $region56: #{vae_forward_padded.1} parent=1 // pred_region
      _
    $region57: #{vae_forward_padded.1} parent=1 // pred_fallthru
      _
    // Predicated region
    $region58: #{vae_forward_padded.1} parent=1 // pred_check
      _
    $region59: #{vae_forward_padded.1} parent=1 // pred_check_branch
      %150 = sbr.rel (0) target = $region61
    $region60: #{vae_forward_padded.1} parent=1 // pred_region
      %152 = dma.done [#allocation3], 64
    $region61: #{vae_forward_padded.1} parent=1 // pred_fallthru
      _
    // Predicated region
    $region62: #{vae_forward_padded.1} parent=1 // pred_check
      _
    $region63: #{vae_forward_padded.1} parent=1 // pred_check_branch
      %154 = sbr.rel (0) target = $region65
    $region64: #{vae_forward_padded.1} parent=1 // pred_region
      %156 = dma.done [#allocation6], 64
    $region65: #{vae_forward_padded.1} parent=1 // pred_fallthru
      _
    // Predicated region
    $region66: #{vae_forward_padded.1} parent=1 // pred_check
      _
    $region67: #{vae_forward_padded.1} parent=1 // pred_check_branch
      %158 = sbr.rel (0) target = $region69
    $region68: #{vae_forward_padded.1} parent=1 // pred_region
      %160 = dma.done [#allocation6], 1024
    $region69: #{vae_forward_padded.1} parent=1 // pred_fallthru
      _
    // Predicated region
    $region70: #{vae_forward_padded.1} parent=1 // pred_check
      _
    $region71: #{vae_forward_padded.1} parent=1 // pred_check_branch
      %162 = sbr.rel (0) target = $region73
    $region72: #{vae_forward_padded.1} parent=1 // pred_region
      %164 = dma.done [#allocation9], 1024
    $region73: #{vae_forward_padded.1} parent=1 // pred_fallthru
      _
    // Predicated region
    $region74: #{vae_forward_padded.1} parent=1 // pred_check
      _
    $region75: #{vae_forward_padded.1} parent=1 // pred_check_branch
      %166 = sbr.rel (0) target = $region77
    $region76: #{vae_forward_padded.1} parent=1 // pred_region
      %168 = dma.done [#allocation9], 1024
    $region77: #{vae_forward_padded.1} parent=1 // pred_fallthru
      _
    // Predicated region
    $region78: #{vae_forward_padded.1} parent=1 // pred_check
      _
    $region79: #{vae_forward_padded.1} parent=1 // pred_check_branch
      %170 = sbr.rel (0) target = $region81
    $region80: #{vae_forward_padded.1} parent=1 // pred_region
      %172 = dma.done [#allocation12], 1024
    $region81: #{vae_forward_padded.1} parent=1 // pred_fallthru
      _
    // Predicated region
    $region82: #{vae_forward_padded.1} parent=1 // pred_check
      _
    $region83: #{vae_forward_padded.1} parent=1 // pred_check_branch
      %174 = sbr.rel (0) target = $region85
    $region84: #{vae_forward_padded.1} parent=1 // pred_region
      %176 = dma.done [#allocation12], 16
    $region85: #{vae_forward_padded.1} parent=1 // pred_fallthru
      _
    // Predicated region
    $region86: #{vae_forward_padded.1} parent=1 // pred_check
      _
    $region87: #{vae_forward_padded.1} parent=1 // pred_check_branch
      %178 = sbr.rel (0) target = $region89
    $region88: #{vae_forward_padded.1} parent=1 // pred_region
      %180 = dma.done [#allocation15], 1024
    $region89: #{vae_forward_padded.1} parent=1 // pred_fallthru
      _
    // Predicated region
    $region90: #{vae_forward_padded.1} parent=1 // pred_check
      _
    $region91: #{vae_forward_padded.1} parent=1 // pred_check_branch
      %182 = sbr.rel (0) target = $region93
    $region92: #{vae_forward_padded.1} parent=1 // pred_region
      %184 = dma.done [#allocation15], 1024
    $region93: #{vae_forward_padded.1} parent=1 // pred_fallthru
      _
    %v185 = vld [vmem:[#allocation2] sm:$0xf]
    %v186 = vld [vmem:[#allocation7] sm:$0xf]
    %v187 = vld [vmem:[#allocation7 + $0x4] sm:$0xf]
    %v188 = vld [vmem:[#allocation7 + $0x8] sm:$0xf]
    %v189 = vld [vmem:[#allocation7 + $0xc] sm:$0xf]
    %v190 = vld [vmem:[#allocation7 + $0x10] sm:$0xf]
    %v191 = vld [vmem:[#allocation7 + $0x14] sm:$0xf]
    %v192 = vld [vmem:[#allocation7 + $0x18] sm:$0xf]
    %v193 = vld [vmem:[#allocation7 + $0x1c] sm:$0xf]
    %v194 = vld [vmem:[#allocation7 + $0x20] sm:$0xf]
    %v195 = vld [vmem:[#allocation7 + $0x24] sm:$0xf]
    %v196 = vld [vmem:[#allocation7 + $0x28] sm:$0xf]
    %v197 = vld [vmem:[#allocation7 + $0x2c] sm:$0xf]
    %v198 = vld [vmem:[#allocation7 + $0x30] sm:$0xf]
    %v199 = vld [vmem:[#allocation7 + $0x34] sm:$0xf]
    %v200 = vld [vmem:[#allocation7 + $0x38] sm:$0xf]
    %v201 = vld [vmem:[#allocation7 + $0x3c] sm:$0xf]
    %v202 = vld [vmem:[%s3] sm:$0x1]
    %v204 = vperm.slane %v202, 0
    %v222 = vunpack.c.l.b16 %v186
    %v223 = vunpack.c.l.b16 %v187
    %v224 = vunpack.c.l.b16 %v188
    %v225 = vunpack.c.l.b16 %v189
    %v226 = vunpack.c.l.b16 %v190
    %v227 = vunpack.c.l.b16 %v191
    %v228 = vunpack.c.l.b16 %v192
    %v229 = vunpack.c.l.b16 %v193
    %v230 = vunpack.c.l.b16 %v194
    %v231 = vunpack.c.l.b16 %v195
    %v232 = vunpack.c.l.b16 %v196
    %v233 = vunpack.c.l.b16 %v197
    %v234 = vunpack.c.l.b16 %v198
    %v235 = vunpack.c.l.b16 %v199
    %v236 = vunpack.c.l.b16 %v200
    %v237 = vunpack.c.l.b16 %v201
    %v238 = vpack.c.b16 %v223, %v222
    %v239 = vpack.c.b16 %v225, %v224
    %v240 = vpack.c.b16 %v227, %v226
    %v241 = vpack.c.b16 %v229, %v228
    %v242 = vpack.c.b16 %v231, %v230
    %v243 = vpack.c.b16 %v233, %v232
    %v244 = vpack.c.b16 %v235, %v234
    %v245 = vpack.c.b16 %v237, %v236
    %254 = vmatpush.bf16.msra.mxu0 %v245
    %255 = vmatpush.bf16.msra.mxu0 %v244
    %256 = vmatpush.bf16.msra.mxu0 %v243
    %257 = vmatpush.bf16.msra.mxu0 %v242
    %258 = vmatpush.bf16.msra.mxu0 %v241
    %259 = vmatpush.bf16.msra.mxu0 %v240
    %260 = vmatpush.bf16.msra.mxu0 %v239
    %261 = vmatpush.bf16.msra.mxu0 %v238
    %262 = vmatmul.bf16.gmra.mxu0 %v185
    %v263 = vpop.f32.mrf.mxu0
    %v264 = vadd.f32 %v204, %v263
    %v265 = vpop.f32.mrf.mxu0
    %266 = vdwg.mxu0
    %v267 = vmax.f32 %v264, 0.0
    %v268 = vpack.c.bf16 %v267, %v267
    %v269 = vld [vmem:[#allocation8] sm:$0xf]
    %v270 = vld [vmem:[#allocation8 + $0x4] sm:$0xf]
    %v271 = vld [vmem:[#allocation8 + $0x8] sm:$0xf]
    %v272 = vld [vmem:[#allocation8 + $0xc] sm:$0xf]
    %v273 = vld [vmem:[#allocation8 + $0x10] sm:$0xf]
    %v274 = vld [vmem:[#allocation8 + $0x14] sm:$0xf]
    %v275 = vld [vmem:[#allocation8 + $0x18] sm:$0xf]
    %v276 = vld [vmem:[#allocation8 + $0x1c] sm:$0xf]
    %v277 = vld [vmem:[#allocation8 + $0x20] sm:$0xf]
    %v278 = vld [vmem:[#allocation8 + $0x24] sm:$0xf]
    %v279 = vld [vmem:[#allocation8 + $0x28] sm:$0xf]
    %v280 = vld [vmem:[#allocation8 + $0x2c] sm:$0xf]
    %v281 = vld [vmem:[#allocation8 + $0x30] sm:$0xf]
    %v282 = vld [vmem:[#allocation8 + $0x34] sm:$0xf]
    %v283 = vld [vmem:[#allocation8 + $0x38] sm:$0xf]
    %v284 = vld [vmem:[#allocation8 + $0x3c] sm:$0xf]
    %v285 = vld [vmem:[%s5] sm:$0x1]
    %v287 = vperm.slane %v285, 0
    %v305 = vunpack.c.l.b16 %v269
    %v306 = vunpack.c.l.b16 %v270
    %v307 = vunpack.c.l.b16 %v271
    %v308 = vunpack.c.l.b16 %v272
    %v309 = vunpack.c.l.b16 %v273
    %v310 = vunpack.c.l.b16 %v274
    %v311 = vunpack.c.l.b16 %v275
    %v312 = vunpack.c.l.b16 %v276
    %v313 = vunpack.c.l.b16 %v277
    %v314 = vunpack.c.l.b16 %v278
    %v315 = vunpack.c.l.b16 %v279
    %v316 = vunpack.c.l.b16 %v280
    %v317 = vunpack.c.l.b16 %v281
    %v318 = vunpack.c.l.b16 %v282
    %v319 = vunpack.c.l.b16 %v283
    %v320 = vunpack.c.l.b16 %v284
    %v321 = vpack.c.b16 %v306, %v305
    %v322 = vpack.c.b16 %v308, %v307
    %v323 = vpack.c.b16 %v310, %v309
    %v324 = vpack.c.b16 %v312, %v311
    %v325 = vpack.c.b16 %v314, %v313
    %v326 = vpack.c.b16 %v316, %v315
    %v327 = vpack.c.b16 %v318, %v317
    %v328 = vpack.c.b16 %v320, %v319
    %337 = vmatpush.bf16.msra.mxu0 %v328
    %338 = vmatpush.bf16.msra.mxu0 %v327
    %339 = vmatpush.bf16.msra.mxu0 %v326
    %340 = vmatpush.bf16.msra.mxu0 %v325
    %341 = vmatpush.bf16.msra.mxu0 %v324
    %342 = vmatpush.bf16.msra.mxu0 %v323
    %343 = vmatpush.bf16.msra.mxu0 %v322
    %344 = vmatpush.bf16.msra.mxu0 %v321
    %345 = vmatmul.bf16.gmra.mxu0 %v268
    %v346 = vpop.f32.mrf.mxu0
    %v347 = vadd.f32 %v287, %v346
    %v348 = vpop.f32.mrf.mxu0
    %349 = vdwg.mxu0
    %v350 = vmax.f32 %v347, 0.0
    %v351 = vpack.c.bf16 %v350, %v350
    %v352 = vld [vmem:[#allocation10] sm:$0xf]
    %v353 = vld [vmem:[#allocation10 + $0x4] sm:$0xf]
    %v354 = vld [vmem:[#allocation10 + $0x8] sm:$0xf]
    %v355 = vld [vmem:[#allocation10 + $0xc] sm:$0xf]
    %v356 = vld [vmem:[#allocation10 + $0x10] sm:$0xf]
    %v357 = vld [vmem:[#allocation10 + $0x14] sm:$0xf]
    %v358 = vld [vmem:[#allocation10 + $0x18] sm:$0xf]
    %v359 = vld [vmem:[#allocation10 + $0x1c] sm:$0xf]
    %v360 = vld [vmem:[#allocation10 + $0x20] sm:$0xf]
    %v361 = vld [vmem:[#allocation10 + $0x24] sm:$0xf]
    %v362 = vld [vmem:[#allocation10 + $0x28] sm:$0xf]
    %v363 = vld [vmem:[#allocation10 + $0x2c] sm:$0xf]
    %v364 = vld [vmem:[#allocation10 + $0x30] sm:$0xf]
    %v365 = vld [vmem:[#allocation10 + $0x34] sm:$0xf]
    %v366 = vld [vmem:[#allocation10 + $0x38] sm:$0xf]
    %v367 = vld [vmem:[#allocation10 + $0x3c] sm:$0xf]
    %v368 = vld [vmem:[%s7] sm:$0x1]
    %v370 = vperm.slane %v368, 0
    %v388 = vunpack.c.l.b16 %v352
    %v389 = vunpack.c.l.b16 %v353
    %v390 = vunpack.c.l.b16 %v354
    %v391 = vunpack.c.l.b16 %v355
    %v392 = vunpack.c.l.b16 %v356
    %v393 = vunpack.c.l.b16 %v357
    %v394 = vunpack.c.l.b16 %v358
    %v395 = vunpack.c.l.b16 %v359
    %v396 = vunpack.c.l.b16 %v360
    %v397 = vunpack.c.l.b16 %v361
    %v398 = vunpack.c.l.b16 %v362
    %v399 = vunpack.c.l.b16 %v363
    %v400 = vunpack.c.l.b16 %v364
    %v401 = vunpack.c.l.b16 %v365
    %v402 = vunpack.c.l.b16 %v366
    %v403 = vunpack.c.l.b16 %v367
    %v404 = vpack.c.b16 %v389, %v388
    %v405 = vpack.c.b16 %v391, %v390
    %v406 = vpack.c.b16 %v393, %v392
    %v407 = vpack.c.b16 %v395, %v394
    %v408 = vpack.c.b16 %v397, %v396
    %v409 = vpack.c.b16 %v399, %v398
    %v410 = vpack.c.b16 %v401, %v400
    %v411 = vpack.c.b16 %v403, %v402
    %420 = vmatpush.bf16.msra.mxu0 %v411
    %421 = vmatpush.bf16.msra.mxu0 %v410
    %422 = vmatpush.bf16.msra.mxu0 %v409
    %423 = vmatpush.bf16.msra.mxu0 %v408
    %424 = vmatpush.bf16.msra.mxu0 %v407
    %425 = vmatpush.bf16.msra.mxu0 %v406
    %426 = vmatpush.bf16.msra.mxu0 %v405
    %427 = vmatpush.bf16.msra.mxu0 %v404
    %428 = vmatmul.bf16.gmra.mxu0 %v351
    %v429 = vpop.f32.mrf.mxu0
    %v430 = vadd.f32 %v370, %v429
    %v431 = vpop.f32.mrf.mxu0
    %432 = vdwg.mxu0
    %433 = vst [vmem:[#allocation18] sm:$0xff] %v430
    %v434 = vlaneseq
    %v435 = vand.u32 %v434, 127
    %vm436 = vcmp.lt.s32.totalorder %v435, 16
    %v437 = vsel %vm436, %v430, 0.0
    %vm438 = vcmp.ge.s32.totalorder %v435, 16
    %vm439 = vcmp.lt.s32.totalorder %v435, 32
    %vm440 = vmand %vm438, %vm439
    %v441 = vsel %vm440, %v430, 0.0
    %v442 = vld [vmem:[#allocation5] sm:$0xf]
    %v443 = vunpack.c.l.bf16 %v442
    %v444 = vmul.f32 %v441, 0.5
    %v445 = vmul.f32 %v444, 1.442695
    %v446 = vpow.pop %v445
    %v447 = vmul.f32 %v443, %v446
    %v448 = vadd.f32 %v437, %v447
    %v449 = vpack.c.bf16 %v448, %v448
    %v450 = vld [vmem:[#allocation11] sm:$0xf]
    %v451 = vld [vmem:[#allocation11 + $0x4] sm:$0xf]
    %v452 = vld [vmem:[#allocation11 + $0x8] sm:$0xf]
    %v453 = vld [vmem:[#allocation11 + $0xc] sm:$0xf]
    %v454 = vld [vmem:[#allocation11 + $0x10] sm:$0xf]
    %v455 = vld [vmem:[#allocation11 + $0x14] sm:$0xf]
    %v456 = vld [vmem:[#allocation11 + $0x18] sm:$0xf]
    %v457 = vld [vmem:[#allocation11 + $0x1c] sm:$0xf]
    %v458 = vld [vmem:[#allocation11 + $0x20] sm:$0xf]
    %v459 = vld [vmem:[#allocation11 + $0x24] sm:$0xf]
    %v460 = vld [vmem:[#allocation11 + $0x28] sm:$0xf]
    %v461 = vld [vmem:[#allocation11 + $0x2c] sm:$0xf]
    %v462 = vld [vmem:[#allocation11 + $0x30] sm:$0xf]
    %v463 = vld [vmem:[#allocation11 + $0x34] sm:$0xf]
    %v464 = vld [vmem:[#allocation11 + $0x38] sm:$0xf]
    %v465 = vld [vmem:[#allocation11 + $0x3c] sm:$0xf]
    %v466 = vld [vmem:[#allocation13] sm:$0x1]
    %v468 = vperm.slane %v466, 0
    %v486 = vunpack.c.l.b16 %v450
    %v487 = vunpack.c.l.b16 %v451
    %v488 = vunpack.c.l.b16 %v452
    %v489 = vunpack.c.l.b16 %v453
    %v490 = vunpack.c.l.b16 %v454
    %v491 = vunpack.c.l.b16 %v455
    %v492 = vunpack.c.l.b16 %v456
    %v493 = vunpack.c.l.b16 %v457
    %v494 = vunpack.c.l.b16 %v458
    %v495 = vunpack.c.l.b16 %v459
    %v496 = vunpack.c.l.b16 %v460
    %v497 = vunpack.c.l.b16 %v461
    %v498 = vunpack.c.l.b16 %v462
    %v499 = vunpack.c.l.b16 %v463
    %v500 = vunpack.c.l.b16 %v464
    %v501 = vunpack.c.l.b16 %v465
    %v502 = vpack.c.b16 %v487, %v486
    %v503 = vpack.c.b16 %v489, %v488
    %v504 = vpack.c.b16 %v491, %v490
    %v505 = vpack.c.b16 %v493, %v492
    %v506 = vpack.c.b16 %v495, %v494
    %v507 = vpack.c.b16 %v497, %v496
    %v508 = vpack.c.b16 %v499, %v498
    %v509 = vpack.c.b16 %v501, %v500
    %518 = vmatpush.bf16.msra.mxu0 %v509
    %519 = vmatpush.bf16.msra.mxu0 %v508
    %520 = vmatpush.bf16.msra.mxu0 %v507
    %521 = vmatpush.bf16.msra.mxu0 %v506
    %522 = vmatpush.bf16.msra.mxu0 %v505
    %523 = vmatpush.bf16.msra.mxu0 %v504
    %524 = vmatpush.bf16.msra.mxu0 %v503
    %525 = vmatpush.bf16.msra.mxu0 %v502
    %526 = vmatmul.bf16.gmra.mxu0 %v449
    %v527 = vpop.f32.mrf.mxu0
    %v528 = vadd.f32 %v468, %v527
    %v529 = vpop.f32.mrf.mxu0
    %530 = vdwg.mxu0
    %v531 = vmax.f32 %v528, 0.0
    %v532 = vpack.c.bf16 %v531, %v531
    %v533 = vld [vmem:[#allocation14] sm:$0xf]
    %v534 = vld [vmem:[#allocation14 + $0x4] sm:$0xf]
    %v535 = vld [vmem:[#allocation14 + $0x8] sm:$0xf]
    %v536 = vld [vmem:[#allocation14 + $0xc] sm:$0xf]
    %v537 = vld [vmem:[#allocation14 + $0x10] sm:$0xf]
    %v538 = vld [vmem:[#allocation14 + $0x14] sm:$0xf]
    %v539 = vld [vmem:[#allocation14 + $0x18] sm:$0xf]
    %v540 = vld [vmem:[#allocation14 + $0x1c] sm:$0xf]
    %v541 = vld [vmem:[#allocation14 + $0x20] sm:$0xf]
    %v542 = vld [vmem:[#allocation14 + $0x24] sm:$0xf]
    %v543 = vld [vmem:[#allocation14 + $0x28] sm:$0xf]
    %v544 = vld [vmem:[#allocation14 + $0x2c] sm:$0xf]
    %v545 = vld [vmem:[#allocation14 + $0x30] sm:$0xf]
    %v546 = vld [vmem:[#allocation14 + $0x34] sm:$0xf]
    %v547 = vld [vmem:[#allocation14 + $0x38] sm:$0xf]
    %v548 = vld [vmem:[#allocation14 + $0x3c] sm:$0xf]
    %v549 = vld [vmem:[%s11] sm:$0x1]
    %v551 = vperm.slane %v549, 0
    %v569 = vunpack.c.l.b16 %v533
    %v570 = vunpack.c.l.b16 %v534
    %v571 = vunpack.c.l.b16 %v535
    %v572 = vunpack.c.l.b16 %v536
    %v573 = vunpack.c.l.b16 %v537
    %v574 = vunpack.c.l.b16 %v538
    %v575 = vunpack.c.l.b16 %v539
    %v576 = vunpack.c.l.b16 %v540
    %v577 = vunpack.c.l.b16 %v541
    %v578 = vunpack.c.l.b16 %v542
    %v579 = vunpack.c.l.b16 %v543
    %v580 = vunpack.c.l.b16 %v544
    %v581 = vunpack.c.l.b16 %v545
    %v582 = vunpack.c.l.b16 %v546
    %v583 = vunpack.c.l.b16 %v547
    %v584 = vunpack.c.l.b16 %v548
    %v585 = vpack.c.b16 %v570, %v569
    %v586 = vpack.c.b16 %v572, %v571
    %v587 = vpack.c.b16 %v574, %v573
    %v588 = vpack.c.b16 %v576, %v575
    %v589 = vpack.c.b16 %v578, %v577
    %v590 = vpack.c.b16 %v580, %v579
    %v591 = vpack.c.b16 %v582, %v581
    %v592 = vpack.c.b16 %v584, %v583
    %601 = vmatpush.bf16.msra.mxu0 %v592
    %602 = vmatpush.bf16.msra.mxu0 %v591
    %603 = vmatpush.bf16.msra.mxu0 %v590
    %604 = vmatpush.bf16.msra.mxu0 %v589
    %605 = vmatpush.bf16.msra.mxu0 %v588
    %606 = vmatpush.bf16.msra.mxu0 %v587
    %607 = vmatpush.bf16.msra.mxu0 %v586
    %608 = vmatpush.bf16.msra.mxu0 %v585
    %609 = vmatmul.bf16.gmra.mxu0 %v532
    %v610 = vpop.f32.mrf.mxu0
    %v611 = vadd.f32 %v551, %v610
    %v612 = vpop.f32.mrf.mxu0
    %613 = vdwg.mxu0
    %v614 = vmax.f32 %v611, 0.0
    %v615 = vpack.c.bf16 %v614, %v614
    %v616 = vld [vmem:[#allocation16] sm:$0xf]
    %v617 = vld [vmem:[#allocation16 + $0x4] sm:$0xf]
    %v618 = vld [vmem:[#allocation16 + $0x8] sm:$0xf]
    %v619 = vld [vmem:[#allocation16 + $0xc] sm:$0xf]
    %v620 = vld [vmem:[#allocation16 + $0x10] sm:$0xf]
    %v621 = vld [vmem:[#allocation16 + $0x14] sm:$0xf]
    %v622 = vld [vmem:[#allocation16 + $0x18] sm:$0xf]
    %v623 = vld [vmem:[#allocation16 + $0x1c] sm:$0xf]
    %v624 = vld [vmem:[#allocation16 + $0x20] sm:$0xf]
    %v625 = vld [vmem:[#allocation16 + $0x24] sm:$0xf]
    %v626 = vld [vmem:[#allocation16 + $0x28] sm:$0xf]
    %v627 = vld [vmem:[#allocation16 + $0x2c] sm:$0xf]
    %v628 = vld [vmem:[#allocation16 + $0x30] sm:$0xf]
    %v629 = vld [vmem:[#allocation16 + $0x34] sm:$0xf]
    %v630 = vld [vmem:[#allocation16 + $0x38] sm:$0xf]
    %v631 = vld [vmem:[#allocation16 + $0x3c] sm:$0xf]
    %v632 = vld [vmem:[%s13] sm:$0x1]
    %v634 = vperm.slane %v632, 0
    %v652 = vunpack.c.l.b16 %v616
    %v653 = vunpack.c.l.b16 %v617
    %v654 = vunpack.c.l.b16 %v618
    %v655 = vunpack.c.l.b16 %v619
    %v656 = vunpack.c.l.b16 %v620
    %v657 = vunpack.c.l.b16 %v621
    %v658 = vunpack.c.l.b16 %v622
    %v659 = vunpack.c.l.b16 %v623
    %v660 = vunpack.c.l.b16 %v624
    %v661 = vunpack.c.l.b16 %v625
    %v662 = vunpack.c.l.b16 %v626
    %v663 = vunpack.c.l.b16 %v627
    %v664 = vunpack.c.l.b16 %v628
    %v665 = vunpack.c.l.b16 %v629
    %v666 = vunpack.c.l.b16 %v630
    %v667 = vunpack.c.l.b16 %v631
    %v668 = vpack.c.b16 %v653, %v652
    %v669 = vpack.c.b16 %v655, %v654
    %v670 = vpack.c.b16 %v657, %v656
    %v671 = vpack.c.b16 %v659, %v658
    %v672 = vpack.c.b16 %v661, %v660
    %v673 = vpack.c.b16 %v663, %v662
    %v674 = vpack.c.b16 %v665, %v664
    %v675 = vpack.c.b16 %v667, %v666
    %684 = vmatpush.bf16.msra.mxu0 %v675
    %685 = vmatpush.bf16.msra.mxu0 %v674
    %686 = vmatpush.bf16.msra.mxu0 %v673
    %687 = vmatpush.bf16.msra.mxu0 %v672
    %688 = vmatpush.bf16.msra.mxu0 %v671
    %689 = vmatpush.bf16.msra.mxu0 %v670
    %690 = vmatpush.bf16.msra.mxu0 %v669
    %691 = vmatpush.bf16.msra.mxu0 %v668
    %692 = vmatmul.bf16.gmra.mxu0 %v615
    %v693 = vpop.f32.mrf.mxu0
    %v694 = vadd.f32 %v634, %v693
    %v695 = vpop.f32.mrf.mxu0
    %696 = vdwg.mxu0
    %v697 = vxor.u32 %v694, 2147483648
    %v698 = vmul.f32 %v697, 1.442695
    %v699 = vpow.pop %v698
    %v700 = vadd.f32 %v699, 1.0
    %v701 = vrcp.pop %v700
    %v702 = vmul.f32 %v700, %v701
    %v703 = vsub.f32 1.0, %v702
    %v704 = vmul.f32 %v701, %v703
    %v705 = vadd.f32 %v701, %v704
    %vm706 = vweird.f32 %v700
    %vm707 = vweird.f32 %v701
    %vm708 = vmor %vm706, %vm707
    %v709 = vsel %vm708, %v701, %v705
    %v710 = vand.u32 2147483647, %v700
    %vm711 = vcmp.eq.f32.partialorder %v710, 8.507059e+37
    %v712 = vand.u32 %v700, 2147483648
    %v713 = vor.u32 1.1754944e-38, %v712
    %v714 = vsel %vm711, %v713, %v709
    %v715 = vmul.f32 1.0, %v714
    %716 = vst [vmem:[#allocation17] sm:$0xff] %v715
    // Predicated region
    $region94: #{vae_forward_padded.1} parent=1 // pred_check
      _
    $region95: #{vae_forward_padded.1} parent=1 // pred_check_branch
      %718 = sbr.rel (0) target = $region97
    $region96: #{vae_forward_padded.1} parent=1 // pred_region
      %720 = vsyncadd [#allocation4], 0
      %s722 = sshll.u32 [#allocation17], 4
      %s723 = int_to_ptr.vmem [resolvable:$true] %s722
      %s724 = sshll.u32 %s14, 4
      %s725 = int_to_ptr.hbm [resolvable:$true] %s724
      %727 = dma.vmem_to_hbm [thread:$0]  %s723, 128, %s725, [#allocation4]
    $region97: #{vae_forward_padded.1} parent=1 // pred_fallthru
      _
    // Predicated region
    $region98: #{vae_forward_padded.1} parent=1 // pred_check
      _
    $region99: #{vae_forward_padded.1} parent=1 // pred_check_branch
      %729 = sbr.rel (0) target = $region101
    $region100: #{vae_forward_padded.1} parent=1 // pred_region
      %731 = vsyncadd [#allocation19], 0
      %s733 = sshll.u32 [#allocation18], 4
      %s734 = int_to_ptr.vmem [resolvable:$true] %s733
      %s735 = sshll.u32 %s15, 4
      %s736 = int_to_ptr.hbm [resolvable:$true] %s735
      %738 = dma.vmem_to_hbm [thread:$0]  %s734, 128, %s736, [#allocation19]
    $region101: #{vae_forward_padded.1} parent=1 // pred_fallthru
      _
    // Predicated region
    $region102: #{vae_forward_padded.1} parent=1 // pred_check
      _
    $region103: #{vae_forward_padded.1} parent=1 // pred_check_branch
      %740 = sbr.rel (0) target = $region105
    $region104: #{vae_forward_padded.1} parent=1 // pred_region
      %742 = dma.done [#allocation4], 128
    $region105: #{vae_forward_padded.1} parent=1 // pred_fallthru
      _
    // Predicated region
    $region106: #{vae_forward_padded.1} parent=1 // pred_check
      _
    $region107: #{vae_forward_padded.1} parent=1 // pred_check_branch
      %744 = sbr.rel (0) target = $region109
    $region108: #{vae_forward_padded.1} parent=1 // pred_region
      %746 = dma.done [#allocation19], 128
    $region109: #{vae_forward_padded.1} parent=1 // pred_fallthru
      _
    %747 = vsyncpa [#allocation3], 1
    %748 = vsyncpa [#allocation6], 1
    %749 = vsyncpa [#allocation9], 1
    %750 = vsyncpa [#allocation12], 1
    %751 = vsyncpa [#allocation15], 1
    %752 = vsyncpa [#allocation4], 1
    %753 = vsyncpa [#allocation19], 1

</llo_original>
